<compile_context>
chip_gen: v7x
topology: tpu7x:2x2x1
jax: 0.10.0
libtpu: 0.0.40
codegen_flags: <defaults>
</compile_context>

<pallas_src>
import functools

import jax
import jax.numpy as jnp
from jax.experimental import pallas as pl
from jax.experimental.pallas import tpu as pltpu


def _proto_kernel(q_ref, s_ref, o_ref, *, way_num, shot_num, mode):
    # q_ref: (TB, nq, c), s_ref: (TB, ws, c), o_ref: (TB, nq, way_num)
    q = q_ref[...]
    s = s_ref[...]
    tb = q.shape[0]
    ws = way_num * shot_num

    # Constant averaging matrix avg[b, w, k] = 1/shot_num iff shot k belongs to
    # way w (support rows are way-major, shots contiguous -- matches reshape
    # (way, shot, c) of the reference).  Built with iota/compare/select so the
    # prototype mean runs as a batched MXU matmul (no reshape, no sublane reduce).
    row = jax.lax.broadcasted_iota(jnp.int32, (tb, way_num, ws), 1)
    col = jax.lax.broadcasted_iota(jnp.int32, (tb, way_num, ws), 2)
    lo = row * shot_num
    hit = (col >= lo) & (col < lo + shot_num)
    avg = jnp.where(hit, 1.0 / shot_num, 0.0).astype(s.dtype)

    proto = jnp.einsum('bws,bsc->bwc', avg, s,
                       preferred_element_type=jnp.float32)      # (TB, way, c) f32

    qf = q.astype(jnp.float32)

    if mode == "euclidean":
        # -||q - p||^2 = 2*q.p - ||q||^2 - ||p||^2   (cross term on the MXU)
        qp = jnp.einsum('bqc,bwc->bqw', q, proto,
                        preferred_element_type=jnp.float32)      # (TB, nq, way)
        q_sq = jnp.sum(qf * qf, axis=-1, keepdims=True)          # (TB, nq, 1)
        p_sq = jnp.sum(proto * proto, axis=-1)                   # (TB, way)
        o_ref[...] = (2.0 * qp - q_sq - p_sq[:, None, :]).astype(o_ref.dtype)
    elif mode == "cos_sim":
        # F.normalize(x, p=2, dim=-1): x / max(||x||, 1e-12)
        #   == x * rsqrt(max(||x||^2, 1e-24))   (rsqrt -> EUP slot)
        q_inv = jax.lax.rsqrt(
            jnp.maximum(jnp.sum(qf * qf, axis=-1, keepdims=True), 1e-24))
        p_inv = jax.lax.rsqrt(
            jnp.maximum(jnp.sum(proto * proto, axis=-1, keepdims=True), 1e-24))
        qn = qf * q_inv
        pn = proto * p_inv
        o_ref[...] = jnp.einsum('bqc,bwc->bqw', qn, pn,
                                preferred_element_type=jnp.float32
                                ).astype(o_ref.dtype)
    else:
        raise ValueError(f"unknown mode: {mode}")


def proto_layer(query_feat, support_feat, way_num, shot_num, query_num,
                mode="euclidean", compute_dtype=None,
                vmem_block_budget_bytes=8 * 1024 * 1024):
    if mode not in ("euclidean", "cos_sim"):
        raise ValueError(f"unknown mode: {mode}")

    t, wq, c = query_feat.shape
    _, ws, _ = support_feat.shape
    nq = way_num * query_num
    assert wq == nq, "query_feat second dim must equal way_num * query_num"
    assert ws == way_num * shot_num, "support_feat second dim must equal way_num * shot_num"

    if compute_dtype is not None:
        query_feat = query_feat.astype(compute_dtype)
        support_feat = support_feat.astype(compute_dtype)

    itemsize = jnp.dtype(query_feat.dtype).itemsize
    per_episode = (nq * c + ws * c) * itemsize + nq * way_num * 4
    # ~2x for the double-buffered pipeline; stays well under the 16 MiB default
    # scoped-VMEM limit of v5e (and the tighter 64 MiB physical VMEM of v7x).
    tb = max(1, vmem_block_budget_bytes // (2 * per_episode))
    if t > 1:
        # keep at least 2 grid steps so v7x's two TensorCores both get work
        tb = min(tb, -(-t // 2))
    tb = int(min(tb, t))

    num_blocks = -(-t // tb)            # cdiv
    t_pad = num_blocks * tb
    if t_pad != t:
        pad = t_pad - t
        query_feat = jnp.pad(query_feat, ((0, pad), (0, 0), (0, 0)))
        support_feat = jnp.pad(support_feat, ((0, pad), (0, 0), (0, 0)))

    kernel = functools.partial(
        _proto_kernel, way_num=way_num, shot_num=shot_num, mode=mode)

    out = pl.pallas_call(
        kernel,
        out_shape=jax.ShapeDtypeStruct((t_pad, nq, way_num), jnp.float32),
        grid=(num_blocks,),
        in_specs=[
            pl.BlockSpec((tb, nq, c), lambda i: (i, 0, 0)),
            pl.BlockSpec((tb, ws, c), lambda i: (i, 0, 0)),
        ],
        out_specs=pl.BlockSpec((tb, nq, way_num), lambda i: (i, 0, 0)),
        compiler_params=pltpu.CompilerParams(
            dimension_semantics=("parallel",)),
    )(query_feat, support_feat)

    return out[:t] if t_pad != t else out


def _reference(query_feat, support_feat, way_num, shot_num, query_num, mode):
    t, wq, c = query_feat.shape
    q = query_feat.reshape(t, way_num * query_num, c)
    s = support_feat.reshape(t, way_num, shot_num, c)
    proto = jnp.mean(s, axis=2)
    if mode == "euclidean":
        return -jnp.sum(
            (q[:, :, None, :] - proto[:, None, :, :]) ** 2, axis=3)
    qn = q / jnp.maximum(jnp.linalg.norm(q, axis=-1, keepdims=True), 1e-12)
    pn = proto / jnp.maximum(jnp.linalg.norm(proto, axis=-1, keepdims=True),
                             1e-12)
    return jnp.einsum("tqc,twc->tqw", qn, pn)


def _check(t, way_num, shot_num, query_num, c, key):
    nq = way_num * query_num
    ns = way_num * shot_num
    kq, ks = jax.random.split(key)
    query_feat = jax.random.normal(kq, (t, nq, c), dtype=jnp.float32)
    support_feat = jax.random.normal(ks, (t, ns, c), dtype=jnp.float32)

    out_euc = proto_layer(query_feat, support_feat, way_num, shot_num,
                          query_num, mode="euclidean")
    out_cos = proto_layer(query_feat, support_feat, way_num, shot_num,
                          query_num, mode="cos_sim")
    jax.block_until_ready((out_euc, out_cos))

    ref_euc = _reference(query_feat, support_feat, way_num, shot_num,
                         query_num, "euclidean")
    ref_cos = _reference(query_feat, support_feat, way_num, shot_num,
                         query_num, "cos_sim")

    assert out_euc.shape == (t, nq, way_num)
    assert out_cos.shape == (t, nq, way_num)
    assert jnp.allclose(out_euc, ref_euc, atol=1e-3, rtol=1e-3)
    assert jnp.allclose(out_cos, ref_cos, atol=1e-3, rtol=1e-3)


if __name__ == "__main__":
    key = jax.random.PRNGKey(0)
    k1, k2 = jax.random.split(key)

    # Small few-shot setup: 2 episodes, 4-way, 2-shot, 4 queries/way, c=32
    _check(t=2, way_num=4, shot_num=2, query_num=4, c=32, key=k1)

    # Second config: exercises episode padding (t not divisible by TB),
    # 1-shot prototypes and way_num=5.
    _check(t=5, way_num=5, shot_num=1, query_num=3, c=64, key=k2)

    print("KERNEL_OK")
</pallas_src>

<mosaic_0001>
module attributes {stable_mosaic.version = 11 : i64} {
  func.func @_proto_kernel(%arg0: i32, %arg1: memref<1x16x32xf32, #tpu.memory_space<vmem>>, %arg2: memref<1x8x32xf32, #tpu.memory_space<vmem>>, %arg3: memref<1x16x4xf32, #tpu.memory_space<vmem>>) attributes {dimension_semantics = [#tpu.dimension_semantics<parallel>], iteration_bounds = array<i64: 2>, scalar_prefetch = 0 : i64, scratch_operands = 0 : i64, tpu.core_type = #tpu.core_type<tc>, window_params = [{transform_indices = @transform_0, window_bounds = array<i64: 1, 16, 32>}, {transform_indices = @transform_1, window_bounds = array<i64: 1, 8, 32>}, {transform_indices = @transform_2, window_bounds = array<i64: 1, 16, 4>}]} {
    %c0 = arith.constant 0 : index
    %c0_0 = arith.constant 0 : index
    %c0_1 = arith.constant 0 : index
    %0 = vector.load %arg1[%c0, %c0_0, %c0_1] : memref<1x16x32xf32, #tpu.memory_space<vmem>>, vector<1x16x32xf32>
    %c0_2 = arith.constant 0 : index
    %c0_3 = arith.constant 0 : index
    %c0_4 = arith.constant 0 : index
    %1 = vector.load %arg2[%c0_2, %c0_3, %c0_4] : memref<1x8x32xf32, #tpu.memory_space<vmem>>, vector<1x8x32xf32>
    %2 = tpu.iota {dimensions = array<i32: 1>} : vector<1x4x8xi32>
    %3 = tpu.iota {dimensions = array<i32: 2>} : vector<1x4x8xi32>
    %c2_i32 = arith.constant 2 : i32
    %4 = vector.broadcast %c2_i32 : i32 to vector<1x4x8xi32>
    %5 = arith.muli %2, %4 : vector<1x4x8xi32>
    %6 = arith.cmpi sge, %3, %5 : vector<1x4x8xi32>
    %c2_i32_5 = arith.constant 2 : i32
    %7 = vector.broadcast %c2_i32_5 : i32 to vector<1x4x8xi32>
    %8 = arith.addi %5, %7 : vector<1x4x8xi32>
    %9 = arith.cmpi slt, %3, %8 : vector<1x4x8xi32>
    %10 = arith.andi %6, %9 : vector<1x4x8xi1>
    %cst = arith.constant 5.000000e-01 : f32
    %cst_6 = arith.constant 0.000000e+00 : f32
    %11 = vector.broadcast %cst : f32 to vector<1x4x8xf32>
    %12 = vector.broadcast %cst_6 : f32 to vector<1x4x8xf32>
    %13 = arith.select %10, %11, %12 : vector<1x4x8xi1>, vector<1x4x8xf32>
    "tpu.trace_start"() <{level = 10 : i32, message = "bws,bsc->bwc"}> : () -> ()
    %cst_7 = arith.constant dense<0.000000e+00> : vector<1x4x32xf32>
    %14 = tpu.matmul %13, %1, %cst_7 {dimension_numbers = #tpu.dot_dimension_numbers<[2], [1], [1], [2], [0, 0, 0, 1, 1, 2], [0], [0]>} : vector<1x4x8xf32>, vector<1x8x32xf32>, vector<1x4x32xf32> -> vector<1x4x32xf32>
    "tpu.trace_stop"() : () -> ()
    "tpu.trace_start"() <{level = 10 : i32, message = "bqc,bwc->bqw"}> : () -> ()
    %cst_8 = arith.constant dense<0.000000e+00> : vector<1x16x4xf32>
    %15 = tpu.matmul %0, %14, %cst_8 {dimension_numbers = #tpu.dot_dimension_numbers<[2], [2], [1], [1], [0, 0, 0, 1, 1, 1], [0], [0]>} : vector<1x16x32xf32>, vector<1x4x32xf32>, vector<1x16x4xf32> -> vector<1x16x4xf32>
    "tpu.trace_stop"() : () -> ()
    %16 = arith.mulf %0, %0 : vector<1x16x32xf32>
    %cst_9 = arith.constant dense<0.000000e+00> : vector<1x16xf32>
    %17 = vector.multi_reduction <add>, %16, %cst_9 [2] : vector<1x16x32xf32> to vector<1x16xf32>
    %18 = vector.shape_cast %17 : vector<1x16xf32> to vector<1x16x1xf32>
    %19 = arith.mulf %14, %14 : vector<1x4x32xf32>
    %cst_10 = arith.constant dense<0.000000e+00> : vector<1x4xf32>
    %20 = vector.multi_reduction <add>, %19, %cst_10 [2] : vector<1x4x32xf32> to vector<1x4xf32>
    %cst_11 = arith.constant 2.000000e+00 : f32
    %21 = vector.broadcast %cst_11 : f32 to vector<1x16x4xf32>
    %22 = arith.mulf %21, %15 : vector<1x16x4xf32>
    %23 = vector.broadcast %18 : vector<1x16x1xf32> to vector<1x16x4xf32>
    %24 = arith.subf %22, %23 : vector<1x16x4xf32>
    %25 = vector.shape_cast %20 : vector<1x4xf32> to vector<1x1x4xf32>
    %26 = vector.broadcast %25 : vector<1x1x4xf32> to vector<1x16x4xf32>
    %27 = arith.subf %24, %26 : vector<1x16x4xf32>
    %c0_12 = arith.constant 0 : index
    %c0_13 = arith.constant 0 : index
    %c0_14 = arith.constant 0 : index
    %28 = vector.load %arg3[%c0_12, %c0_13, %c0_14] : memref<1x16x4xf32, #tpu.memory_space<vmem>>, vector<1x16x4xf32>
    tpu.vector_store %arg3[%c0_12, %c0_13, %c0_14], %27 {strides = array<i32>} : memref<1x16x4xf32, #tpu.memory_space<vmem>>, vector<1x16x4xf32>,
    return
  }
  func.func @transform_0(%arg0: i32) -> (i32, i32, i32) {
    %c0_i32 = arith.constant 0 : i32
    %c0_i32_0 = arith.constant 0 : i32
    %c0_i32_1 = arith.constant 0 : i32
    return %arg0, %c0_i32, %c0_i32_0 : i32, i32, i32
  }
  func.func @transform_1(%arg0: i32) -> (i32, i32, i32) {
    %c0_i32 = arith.constant 0 : i32
    %c0_i32_0 = arith.constant 0 : i32
    %c0_i32_1 = arith.constant 0 : i32
    return %arg0, %c0_i32, %c0_i32_0 : i32, i32, i32
  }
  func.func @transform_2(%arg0: i32) -> (i32, i32, i32) {
    %c0_i32 = arith.constant 0 : i32
    %c0_i32_0 = arith.constant 0 : i32
    %c0_i32_1 = arith.constant 0 : i32
    return %arg0, %c0_i32, %c0_i32_0 : i32, i32, i32
  }
}

</mosaic_0001>

<llo_original>
// kernel: tpu_custom_call.1
$region0: #{tpu_custom_call.1}
  #allocation0 [shape = 'u32[]', space=smem, size = 0x4, offset = 0x4, fixed_abs, tag = 'smem constant byte address 0x4 - core index']
  #allocation1 [shape = 'u32[144,128]{1,0:T(1,128)}', space=vmem, size = 0x12000, scoped, tag = 'internal scratch']
  %s0 = inlined_call_operand.hbm [shape: f32[2,16,32], index: 0, kind: input, shape index: {}]
  %s1 = inlined_call_operand.hbm [shape: f32[2,8,32], index: 1, kind: input, shape index: {}]
  %s2 = inlined_call_operand.vmem [shape: f32[2,16,4], index: 2, kind: output, shape index: {}]
  %s3 = sld [smem:[#allocation0]]
  $region49: #{tpu_custom_call.1} parent=0
    _
  %s5 = ssub.s32 1, %s3
  %s6 = scalar_select 0, %s5, %s3
  $region1: #{tpu_custom_call.1} parent=0
    #allocation2 [shape = 'u8[16384]{0}', space=vmem, size = 0x4000, scoped, tag = 'input window, operand 0']
    #allocation3 [shape = 's32[2]{0}', space=sflag, size = 0x8, scoped, tag = 'scoped memory for tpu_custom_call.1']
    #allocation4 [shape = 'u8[8192]{0}', space=vmem, size = 0x2000, scoped, tag = 'input window, operand 1']
    #allocation5 [shape = 's32[2]{0}', space=sflag, size = 0x8, scoped, tag = 'scoped memory for tpu_custom_call.1']
    %7 = vsyncpa [#allocation3], 0
    %s8 = scalar_lea.sflag [#allocation3], 1
    %9 = vsyncpa %s8, 0
    %10 = vsyncpa [#allocation5], 0
    %s11 = scalar_lea.sflag [#allocation5], 1
    %12 = vsyncpa %s11, 0
    loop: start=0, step=1, limit=4
    $region2: #{tpu_custom_call.1} parent=1 // loop_pre_header
      _
    $region3: #{tpu_custom_call.1} parent=1 // loop_header
      %s14 = sphi 0, %s18
      %p15 = scmp.ge.s32.totalorder %s14, 4
      %s24 = sphi 0, %s26
      %s27 = sphi 0, %s24
      %s28 = sphi 0, %s27
      %s44 = sphi 0, %s28
      %s50 = sphi 0, %s52
      %s53 = sphi 0, %s50
      %s54 = sphi 0, %s53
      %s70 = sphi 0, %s54
      %s76 = sphi 0, %s78
      %s79 = sphi 0, %s76
      %s80 = sphi 0, %s79
      %s96 = sphi 0, %s80
    $region4: #{tpu_custom_call.1} parent=1 // loop_header_branch
      %17 = sbr.rel (%p15) target = $region8
    $region5: #{tpu_custom_call.1} parent=1 // loop_body
      %s19 = ssub.s32 %s14, 1
      %s20 = ssub.s32 %s14, 2
      %s21 = sadd.s32 %s14, 1
      %s22 = ssub.s32 %s14, %s21
      %p23 = scmp.eq.s32.totalorder %s22, 0
      %s25 = sadd.s32 %s24, 1
      %s26 = scalar_select %p23, %s24, %s25
      %p29 = pneg %p23
      %p30 = scmp.eq.s32.totalorder %s14, 1
      %p31 = por %p29, %p30
      %p32 = scmp.ne.s32.totalorder %s24, %s27
      %p33 = scmp.eq.s32.totalorder %s14, 0
      %p34 = por %p32, %p33
      %p35 = scmp.ne.s32.totalorder %s24, %s27
      %p36 = scmp.eq.s32.totalorder %s19, 1
      %p37 = por %p35, %p36
      %p38 = scmp.ne.s32.totalorder %s27, %s28
      %p39 = scmp.eq.s32.totalorder %s19, 0
      %p40 = por %p38, %p39
      %p41 = scmp.ne.s32.totalorder %s27, %s28
      %p42 = scmp.eq.s32.totalorder %s20, 1
      %p43 = por %p41, %p42
      %p45 = scmp.ne.s32.totalorder %s28, %s44
      %p46 = scmp.eq.s32.totalorder %s20, 0
      %p47 = por %p45, %p46
      %s48 = ssub.s32 %s14, %s21
      %p49 = scmp.eq.s32.totalorder %s48, 0
      %s51 = sadd.s32 %s50, 1
      %s52 = scalar_select %p49, %s50, %s51
      %p55 = pneg %p49
      %p56 = scmp.eq.s32.totalorder %s14, 1
      %p57 = por %p55, %p56
      %p58 = scmp.ne.s32.totalorder %s50, %s53
      %p59 = scmp.eq.s32.totalorder %s14, 0
      %p60 = por %p58, %p59
      %p61 = scmp.ne.s32.totalorder %s50, %s53
      %p62 = scmp.eq.s32.totalorder %s19, 1
      %p63 = por %p61, %p62
      %p64 = scmp.ne.s32.totalorder %s53, %s54
      %p65 = scmp.eq.s32.totalorder %s19, 0
      %p66 = por %p64, %p65
      %p67 = scmp.ne.s32.totalorder %s53, %s54
      %p68 = scmp.eq.s32.totalorder %s20, 1
      %p69 = por %p67, %p68
      %p71 = scmp.ne.s32.totalorder %s54, %s70
      %p72 = scmp.eq.s32.totalorder %s20, 0
      %p73 = por %p71, %p72
      %s74 = ssub.s32 %s14, %s21
      %p75 = scmp.eq.s32.totalorder %s74, 0
      %s77 = sadd.s32 %s76, 1
      %s78 = scalar_select %p75, %s76, %s77
      %p81 = pneg %p75
      %p82 = scmp.eq.s32.totalorder %s14, 1
      %p83 = por %p81, %p82
      %p84 = scmp.ne.s32.totalorder %s76, %s79
      %p85 = scmp.eq.s32.totalorder %s14, 0
      %p86 = por %p84, %p85
      %p87 = scmp.ne.s32.totalorder %s76, %s79
      %p88 = scmp.eq.s32.totalorder %s19, 1
      %p89 = por %p87, %p88
      %p90 = scmp.ne.s32.totalorder %s79, %s80
      %p91 = scmp.eq.s32.totalorder %s19, 0
      %p92 = por %p90, %p91
      %p93 = scmp.ne.s32.totalorder %s79, %s80
      %p94 = scmp.eq.s32.totalorder %s20, 1
      %p95 = por %p93, %p94
      %p97 = scmp.ne.s32.totalorder %s80, %s96
      %p98 = scmp.eq.s32.totalorder %s20, 0
      %p99 = por %p97, %p98
      %p100 = scmp.le.s32.totalorder 1, %s14
      %p101 = scmp.lt.s32.totalorder %s14, 3
      %p102 = pnand %p100, %p101
      %p103 = pneg %p102
      // Predicated region
      $region9: #{tpu_custom_call.1} parent=5 // pred_check
        _
      $region10: #{tpu_custom_call.1} parent=5 // pred_check_branch
        %105 = sbr.rel (%p102) target = $region12
      $region11: #{tpu_custom_call.1} parent=5 // pred_region
        %s106 = ssub.s32 %s14, 1
      $region12: #{tpu_custom_call.1} parent=5 // pred_fallthru
        _
      %p107 = scmp.lt.s32.totalorder %s14, 2
      // Predicated region
      $region13: #{tpu_custom_call.1} parent=5 // pred_check
        %p108 = pneg %p107
      $region14: #{tpu_custom_call.1} parent=5 // pred_check_branch
        %110 = sbr.rel (%p108) target = $region16
      $region15: #{tpu_custom_call.1} parent=5 // pred_region
        // Predicated region
        $region17: #{tpu_custom_call.1} parent=15 // pred_check
          %p111 = pneg %p34
        $region18: #{tpu_custom_call.1} parent=15 // pred_check_branch
          %113 = sbr.rel (%p111) target = $region20
        $region19: #{tpu_custom_call.1} parent=15 // pred_region
          %s114 = sand.u32 %s24, 1
          %s115 = scalar_lea.sflag [#allocation3], %s114
          %s116 = sand.u32 %s24, 1
          %s117 = smul.addr %s116, 16
          %s118 = scalar_lea.vmem [#allocation2], %s117
          %s120 = ssub.s32 256, 256
          %121 = vsyncadd %s115, %s120
          %s122 = smul.addr %s14, 2
          %s123 = smul.addr %s122, 128
          %s124 = scalar_lea.hbm %s0, %s123
          %s125 = sshll.u32 %s118, 4
          %s126 = int_to_ptr.vmem [resolvable:$true] %s125
          %131 = dma.hbm_to_vmem [thread:$0]  %s124, 256, %s126, %s115, 128, 128, 8
        $region20: #{tpu_custom_call.1} parent=15 // pred_fallthru
          _
        // Predicated region
        $region21: #{tpu_custom_call.1} parent=15 // pred_check
          %p132 = pneg %p60
        $region22: #{tpu_custom_call.1} parent=15 // pred_check_branch
          %134 = sbr.rel (%p132) target = $region24
        $region23: #{tpu_custom_call.1} parent=15 // pred_region
          %s135 = sand.u32 %s50, 1
          %s136 = scalar_lea.sflag [#allocation5], %s135
          %s137 = sand.u32 %s50, 1
          %s138 = smul.addr %s137, 8
          %s139 = scalar_lea.vmem [#allocation4], %s138
          %s141 = ssub.s32 128, 128
          %142 = vsyncadd %s136, %s141
          %s143 = smul.addr %s14, 128
          %s144 = scalar_lea.hbm %s1, %s143
          %s146 = sshll.u32 %s139, 4
          %s147 = int_to_ptr.vmem [resolvable:$true] %s146
          %149 = dma.hbm_to_vmem [thread:$0]  %s144, 128, %s147, %s136
        $region24: #{tpu_custom_call.1} parent=15 // pred_fallthru
          _
      $region16: #{tpu_custom_call.1} parent=5 // pred_fallthru
        _
      %p150 = scmp.le.s32.totalorder 1, %s14
      %p151 = scmp.lt.s32.totalorder %s14, 3
      %p152 = pnand %p150, %p151
      %p153 = pneg %p152
      // Predicated region
      $region25: #{tpu_custom_call.1} parent=5 // pred_check
        _
      $region26: #{tpu_custom_call.1} parent=5 // pred_check_branch
        %155 = sbr.rel (%p152) target = $region28
      $region27: #{tpu_custom_call.1} parent=5 // pred_region
        %s156 = ssub.s32 %s14, 1
        %s157 = sand.u32 %s27, 1
        %s158 = scalar_lea.sflag [#allocation3], %s157
        %s159 = sand.u32 %s27, 1
        %s160 = smul.addr %s159, 16
        %s161 = scalar_lea.vmem [#allocation2], %s160
        // Predicated region
        $region29: #{tpu_custom_call.1} parent=27 // pred_check
          %p162 = pneg %p40
        $region30: #{tpu_custom_call.1} parent=27 // pred_check_branch
          %164 = sbr.rel (%p162) target = $region32
        $region31: #{tpu_custom_call.1} parent=27 // pred_region
          %165 = dma.done %s158, 256
        $region32: #{tpu_custom_call.1} parent=27 // pred_fallthru
          _
        %s166 = sand.u32 %s53, 1
        %s167 = scalar_lea.sflag [#allocation5], %s166
        %s168 = sand.u32 %s53, 1
        %s169 = smul.addr %s168, 8
        %s170 = scalar_lea.vmem [#allocation4], %s169
        // Predicated region
        $region33: #{tpu_custom_call.1} parent=27 // pred_check
          %p171 = pneg %p66
        $region34: #{tpu_custom_call.1} parent=27 // pred_check_branch
          %173 = sbr.rel (%p171) target = $region36
        $region35: #{tpu_custom_call.1} parent=27 // pred_region
          %174 = dma.done %s167, 128
        $region36: #{tpu_custom_call.1} parent=27 // pred_fallthru
          _
        %s175 = sand.u32 %s27, 1
        %s176 = scalar_lea.sflag [#allocation3], %s175
        %s177 = sand.u32 %s27, 1
        %s178 = smul.addr %s177, 16
        %s179 = scalar_lea.vmem [#allocation2], %s178
        %p180 = pneg %p40
        %p181 = pneg %p37
        %s182 = sand.u32 %s53, 1
        %s183 = scalar_lea.sflag [#allocation5], %s182
        %s184 = sand.u32 %s53, 1
        %s185 = smul.addr %s184, 8
        %s186 = scalar_lea.vmem [#allocation4], %s185
        %p187 = pneg %p66
        %p188 = pneg %p63
        %p189 = pneg %p92
        %p190 = pneg %p89
        %p191 = scmp.lt.s32.totalorder %s19, 1
        %s192 = scalar_select %p191, %s19, 1
        %s193 = smul.addr %s192, 2
        %s194 = smul.addr %s193, 8
        %s195 = scalar_lea.vmem %s2, %s194
        %p196 = scmp.lt.s32.totalorder %s19, 1
        %s197 = scalar_select %p196, %s19, 1
        %s198 = smul.addr %s197, 2
        %s199 = smul.addr %s198, 8
        %s200 = scalar_lea.vmem %s2, %s199
        %v201 = vld [vmem:[%s161] sm:$0xff]
        %v202 = vld [vmem:[%s161 + $0x8] sm:$0xff]
        %v203 = vld [vmem:[%s170] sm:$0xff]
        %v204 = vlaneseq
        %v205 = vshrl.u32 %v204, 7
        %v206 = vlaneseq
        %v207 = vand.u32 %v206, 127
        %v208 = vmul.u32 %v205, 2
        %vm209 = vcmp.ge.s32.totalorder %v207, %v208
        %v210 = vadd.s32 %v208, 2
        %vm211 = vcmp.lt.s32.totalorder %v207, %v210
        %vm212 = vmand %vm209, %vm211
        %v213 = vsel %vm212, 0.5, 0.0
        %vm214 = vcmask 64512
        %v216 = vsel %vm214, %v213, 0
        %218 = vmatprep.subr.mxu0 0.0
        %219 = vmatpush1.msra.mxu0 %v203
        %220 = vmatprep.subr.mxu0 0.0
        %221 = vmatpush1.msra.mxu0 0.0
        %222 = vmatprep.subr.mxu0 0.0
        %223 = vmatpush1.msra.mxu0 0.0
        %224 = vmatprep.subr.mxu0 0.0
        %225 = vmatpush1.msra.mxu0 0.0
        %226 = vmatprep.subr.mxu0 0.0
        %227 = vmatpush1.msra.mxu0 0.0
        %228 = vmatprep.subr.mxu0 0.0
        %229 = vmatpush1.msra.mxu0 0.0
        %230 = vmatprep.subr.mxu0 0.0
        %231 = vmatpush1.msra.mxu0 0.0
        %232 = vmatprep.subr.mxu0 0.0
        %233 = vmatpush1.msra.mxu0 0.0
        %234 = vmatprep.subr.mxu0 0.0
        %235 = vmatpush1.msra.mxu0 0.0
        %236 = vmatprep.subr.mxu0 0.0
        %237 = vmatpush1.msra.mxu0 0.0
        %238 = vmatprep.subr.mxu0 0.0
        %239 = vmatpush1.msra.mxu0 0.0
        %240 = vmatprep.subr.mxu0 0.0
        %241 = vmatpush1.msra.mxu0 0.0
        %242 = vmatprep.subr.mxu0 0.0
        %243 = vmatpush1.msra.mxu0 0.0
        %244 = vmatprep.subr.mxu0 0.0
        %245 = vmatpush1.msra.mxu0 0.0
        %246 = vmatprep.subr.mxu0 0.0
        %247 = vmatpush1.msra.mxu0 0.0
        %248 = vmatprep.subr.mxu0 0.0
        %249 = vmatpush1.msra.mxu0 0.0
        %250 = vmatprep.subr.mxu0 0.0
        %251 = vmatpush1.msra.mxu0 0.0
        %252 = vmatprep.subr.mxu0 0.0
        %253 = vmatpush1.msra.mxu0 0.0
        %254 = vmatprep.subr.mxu0 0.0
        %255 = vmatpush1.msra.mxu0 0.0
        %256 = vmatprep.subr.mxu0 0.0
        %257 = vmatpush1.msra.mxu0 0.0
        %258 = vmatprep.subr.mxu0 0.0
        %259 = vmatpush1.msra.mxu0 0.0
        %260 = vmatprep.subr.mxu0 0.0
        %261 = vmatpush1.msra.mxu0 0.0
        %262 = vmatprep.subr.mxu0 0.0
        %263 = vmatpush1.msra.mxu0 0.0
        %264 = vmatprep.subr.mxu0 0.0
        %265 = vmatpush1.msra.mxu0 0.0
        %266 = vmatprep.subr.mxu0 0.0
        %267 = vmatpush1.msra.mxu0 0.0
        %268 = vmatprep.subr.mxu0 0.0
        %269 = vmatpush1.msra.mxu0 0.0
        %270 = vmatprep.subr.mxu0 0.0
        %271 = vmatpush1.msra.mxu0 0.0
        %272 = vmatprep.subr.mxu0 0.0
        %273 = vmatpush1.msra.mxu0 0.0
        %274 = vmatprep.subr.mxu0 0.0
        %275 = vmatpush1.msra.mxu0 0.0
        %276 = vmatprep.subr.mxu0 0.0
        %277 = vmatpush1.msra.mxu0 0.0
        %278 = vmatprep.subr.mxu0 0.0
        %279 = vmatpush1.msra.mxu0 0.0
        %280 = vmatprep.subr.mxu0 0.0
        %281 = vmatpush1.msra.mxu0 0.0
        %282 = vmatprep.mubr.f32.mxu0 0.0
        %283 = vmatmul.mubr.f32.gmra.mrb[0].mxu0 %v216
        %v284 = vpop.f32.mrb[0].mxu0
        %v285 = vadd.f32 0.0, %v284
        %v286 = vpop.f32.mrb[0].mxu0
        %287 = vdwg.mxu0
        %vm288 = vcmask 261120
        %v290 = vsel %vm288, %v201, 0
        %v293 = vsel %vm288, %v202, 0
        %v296 = vsel %vm288, %v285, 0
        %298 = vmatprep.subr.mxu0 0.0
        %299 = vmatpush1.xpose.msra.mxu0 %v296
        %300 = vmatprep.subr.mxu0 0.0
        %301 = vmatpush1.xpose.msra.mxu0 0.0
        %302 = vmatprep.subr.mxu0 0.0
        %303 = vmatpush1.xpose.msra.mxu0 0.0
        %304 = vmatprep.subr.mxu0 0.0
        %305 = vmatpush1.xpose.msra.mxu0 0.0
        %306 = vmatprep.subr.mxu0 0.0
        %307 = vmatpush1.xpose.msra.mxu0 0.0
        %308 = vmatprep.subr.mxu0 0.0
        %309 = vmatpush1.xpose.msra.mxu0 0.0
        %310 = vmatprep.subr.mxu0 0.0
        %311 = vmatpush1.xpose.msra.mxu0 0.0
        %312 = vmatprep.subr.mxu0 0.0
        %313 = vmatpush1.xpose.msra.mxu0 0.0
        %314 = vmatprep.subr.mxu0 0.0
        %315 = vmatpush1.xpose.msra.mxu0 0.0
        %316 = vmatprep.subr.mxu0 0.0
        %317 = vmatpush1.xpose.msra.mxu0 0.0
        %318 = vmatprep.subr.mxu0 0.0
        %319 = vmatpush1.xpose.msra.mxu0 0.0
        %320 = vmatprep.subr.mxu0 0.0
        %321 = vmatpush1.xpose.msra.mxu0 0.0
        %322 = vmatprep.subr.mxu0 0.0
        %323 = vmatpush1.xpose.msra.mxu0 0.0
        %324 = vmatprep.subr.mxu0 0.0
        %325 = vmatpush1.xpose.msra.mxu0 0.0
        %326 = vmatprep.subr.mxu0 0.0
        %327 = vmatpush1.xpose.msra.mxu0 0.0
        %328 = vmatprep.subr.mxu0 0.0
        %329 = vmatpush1.xpose.msra.mxu0 0.0
        %330 = vmatprep.subr.mxu0 0.0
        %331 = vmatpush1.xpose.msra.mxu0 0.0
        %332 = vmatprep.subr.mxu0 0.0
        %333 = vmatpush1.xpose.msra.mxu0 0.0
        %334 = vmatprep.subr.mxu0 0.0
        %335 = vmatpush1.xpose.msra.mxu0 0.0
        %336 = vmatprep.subr.mxu0 0.0
        %337 = vmatpush1.xpose.msra.mxu0 0.0
        %338 = vmatprep.subr.mxu0 0.0
        %339 = vmatpush1.xpose.msra.mxu0 0.0
        %340 = vmatprep.subr.mxu0 0.0
        %341 = vmatpush1.xpose.msra.mxu0 0.0
        %342 = vmatprep.subr.mxu0 0.0
        %343 = vmatpush1.xpose.msra.mxu0 0.0
        %344 = vmatprep.subr.mxu0 0.0
        %345 = vmatpush1.xpose.msra.mxu0 0.0
        %346 = vmatprep.subr.mxu0 0.0
        %347 = vmatpush1.xpose.msra.mxu0 0.0
        %348 = vmatprep.subr.mxu0 0.0
        %349 = vmatpush1.xpose.msra.mxu0 0.0
        %350 = vmatprep.subr.mxu0 0.0
        %351 = vmatpush1.xpose.msra.mxu0 0.0
        %352 = vmatprep.subr.mxu0 0.0
        %353 = vmatpush1.xpose.msra.mxu0 0.0
        %354 = vmatprep.subr.mxu0 0.0
        %355 = vmatpush1.xpose.msra.mxu0 0.0
        %356 = vmatprep.subr.mxu0 0.0
        %357 = vmatpush1.xpose.msra.mxu0 0.0
        %358 = vmatprep.subr.mxu0 0.0
        %359 = vmatpush1.xpose.msra.mxu0 0.0
        %360 = vmatprep.subr.mxu0 0.0
        %361 = vmatpush1.xpose.msra.mxu0 0.0
        %362 = vmatprep.mubr.f32.mxu0 0.0
        %363 = vmatmul.mubr.f32.gmra.mrb[0].mxu0 %v290
        %v364 = vpop.f32.mrb[0].mxu0
        %v365 = vadd.f32 0.0, %v364
        %v366 = vpop.f32.mrb[0].mxu0
        %367 = vmatprep.mubr.f32.mxu0 0.0
        %368 = vmatmul.mubr.f32.gmra.mrb[0].mxu0 %v293
        %v369 = vpop.f32.mrb[0].mxu0
        %v370 = vadd.f32 0.0, %v369
        %v371 = vpop.f32.mrb[0].mxu0
        %372 = vdwg.mxu0
        %v373 = vmul.f32 %v201, %v201
        %v374 = vmul.f32 %v202, %v202
        %v375 = vsel %vm288, %v373, 0.0
        %376 = vadd.xlane.f32.xlu0 %v375
        %v377 = vpop.xlane.xlu0 %376
        %v378 = vsel %vm288, %v374, 0.0
        %379 = vadd.xlane.f32.xlu0 %v378
        %v380 = vpop.xlane.xlu0 %379
        %v381 = vmul.f32 %v285, %v285
        %vm382 = vcmask 257024
        %v383 = vsel %vm382, %v381, 0.0
        %384 = vadd.xlane.f32.xlu0 %v383
        %v385 = vpop.xlane.xlu0 %384
        %v386 = vmul.f32 %v365, 2.0
        %v387 = vmul.f32 %v370, 2.0
        %v388 = vsub.f32 %v386, %v377
        %v389 = vsub.f32 %v387, %v380
        %v391 = vlaneseq
        %v392 = vshrl.u32 %v391, 7
        %v393 = vsub.s32 %v207, %v392
        %v394 = vrot.slane %v385, %v393
        %vm395 = vcmask 1042434
        %v396 = vsel %vm395, %v394, %v394
        %vm397 = vcmask 1043459
        %v398 = vsel %vm397, %v394, %v396
        %vm399 = vcmask 1044484
        %v400 = vsel %vm399, %v394, %v398
        %vm401 = vcmask 1045509
        %v402 = vsel %vm401, %v394, %v400
        %vm403 = vcmask 1046534
        %v404 = vsel %vm403, %v394, %v402
        %vm405 = vcmask 1047559
        %v406 = vsel %vm405, %v394, %v404
        %v408 = vsub.f32 %v388, %v406
        %v409 = vsub.f32 %v389, %v406
        %vm410 = vcmask 31744
        %411 = vst.msk [vmem:[%s200] sm:$0xff] %vm410, %v408
        %412 = vst.msk [vmem:[%s200 + $0x8] sm:$0xff] %vm410, %v409
        %p413 = scmp.lt.s32.totalorder %s19, 1
        %s414 = scalar_select %p413, %s19, 1
        %s415 = smul.addr %s414, 2
        %s416 = smul.addr %s415, 8
        %s417 = scalar_lea.vmem %s2, %s416
        // Predicated region
        $region37: #{tpu_custom_call.1} parent=27 // pred_check
          %p418 = pneg %p89
        $region38: #{tpu_custom_call.1} parent=27 // pred_check_branch
          %420 = sbr.rel (%p418) target = $region40
        $region39: #{tpu_custom_call.1} parent=27 // pred_region
          _
        $region40: #{tpu_custom_call.1} parent=27 // pred_fallthru
          _
      $region28: #{tpu_custom_call.1} parent=5 // pred_fallthru
        _
      %p421 = scmp.le.s32.totalorder 2, %s14
      // Predicated region
      $region41: #{tpu_custom_call.1} parent=5 // pred_check
        %p422 = pneg %p421
      $region42: #{tpu_custom_call.1} parent=5 // pred_check_branch
        %424 = sbr.rel (%p422) target = $region44
      $region43: #{tpu_custom_call.1} parent=5 // pred_region
        %s425 = ssub.s32 %s14, 2
        // Predicated region
        $region45: #{tpu_custom_call.1} parent=43 // pred_check
          %p426 = pneg %p95
        $region46: #{tpu_custom_call.1} parent=43 // pred_check_branch
          %428 = sbr.rel (%p426) target = $region48
        $region47: #{tpu_custom_call.1} parent=43 // pred_region
          %p429 = scmp.lt.s32.totalorder %s20, 1
          %s430 = scalar_select %p429, %s20, 1
          %s431 = smul.addr %s430, 2
          %s432 = smul.addr %s431, 8
          %s433 = scalar_lea.vmem %s2, %s432
        $region48: #{tpu_custom_call.1} parent=43 // pred_fallthru
          _
      $region44: #{tpu_custom_call.1} parent=5 // pred_fallthru
        _
    $region6: #{tpu_custom_call.1} parent=1 // loop_footer
      %s18 = sadd.s32 1, %s14
    $region7: #{tpu_custom_call.1} parent=1 // loop_footer_branch
      %13 = sbr.rel target = $region3
    $region8: #{tpu_custom_call.1} parent=1 // loop_exit
      _
    %434 = vsyncpa [#allocation3], 1
    %s435 = scalar_lea.sflag [#allocation3], 1
    %436 = vsyncpa %s435, 1
    %437 = vsyncpa [#allocation5], 1
    %s438 = scalar_lea.sflag [#allocation5], 1
    %439 = vsyncpa %s438, 1

</llo_original>
